<compile_context>
chip_gen: v6e
topology: v6e:2x2x1
jax: 0.10.0
libtpu: 0.0.40
codegen_flags: <defaults>
</compile_context>

<pallas_src>
import functools
import math

import jax
import jax.numpy as jnp
from jax.experimental import pallas as pl
from jax.experimental.pallas import tpu as pltpu

# MXU operand dtype for the encoder matmuls (accumulation is always f32).
MXU_DTYPE = jnp.bfloat16


# ----------------------------------------------------------------------------
# tiling helpers
# ----------------------------------------------------------------------------
def _pick_row_tile(m, cap=256):
    """Largest multiple-of-8 divisor of m that is <= cap; full m for tiny/odd m."""
    if m % 8 != 0:
        return m
    for cand in (256, 128, 64, 32, 16, 8):
        if cand <= cap and m % cand == 0:
            return cand
    return m


def _pick_col_tile(n, cap=512):
    """Column tile: full N when small; otherwise a 128-multiple divisor <= cap."""
    if n <= cap:
        return n
    for cand in (512, 256, 128):
        if cand <= cap and n % cand == 0:
            return cand
    return n


# ----------------------------------------------------------------------------
# Pallas kernels
# ----------------------------------------------------------------------------
def _dense_kernel(x_ref, w_ref, b_ref, o_ref, *, activation):
    x = x_ref[...].astype(MXU_DTYPE)
    w = w_ref[...].astype(MXU_DTYPE)
    y = jnp.dot(x, w, preferred_element_type=jnp.float32) + b_ref[...]
    if activation == "gelu":
        # TODO(synk): tanh-approx GELU; PyTorch nn.GELU defaults to exact erf
        # (tiny numeric drift, kept for robust Mosaic lowering).
        y = 0.5 * y * (1.0 + jnp.tanh(0.7978845608028654 * (y + 0.044715 * y * y * y)))
    elif activation == "tanh":
        y = jnp.tanh(y)
    o_ref[...] = y.astype(o_ref.dtype)


def dense(x, w, b, activation="none"):
    """y = activation(x @ w + b); x: (M, K), w: (K, N), b: (N,)."""
    M, K = x.shape
    _, N = w.shape
    tm = _pick_row_tile(M)
    tn = _pick_col_tile(N)
    return pl.pallas_call(
        functools.partial(_dense_kernel, activation=activation),
        out_shape=jax.ShapeDtypeStruct((M, N), jnp.float32),
        grid=(M // tm, N // tn),
        in_specs=[
            pl.BlockSpec((tm, K), lambda i, j: (i, 0)),
            pl.BlockSpec((K, tn), lambda i, j: (0, j)),
            pl.BlockSpec((1, tn), lambda i, j: (0, j)),
        ],
        out_specs=pl.BlockSpec((tm, tn), lambda i, j: (i, j)),
        compiler_params=pltpu.CompilerParams(
            dimension_semantics=("parallel", "parallel")),
    )(x, w, b.reshape(1, N))


def _layernorm_kernel(*refs, eps, has_residual):
    if has_residual:
        x_ref, r_ref, g_ref, b_ref, o_ref = refs
        x = x_ref[...] + r_ref[...]          # fused residual add
    else:
        x_ref, g_ref, b_ref, o_ref = refs
        x = x_ref[...]
    mu = jnp.mean(x, axis=-1, keepdims=True)
    var = jnp.mean((x - mu) ** 2, axis=-1, keepdims=True)
    inv = jax.lax.rsqrt(var + eps)
    o_ref[...] = ((x - mu) * inv * g_ref[...] + b_ref[...]).astype(o_ref.dtype)


def layernorm(x, g, b, residual=None, eps=1e-12):
    """LayerNorm(x + residual) over the last axis; x/(residual): (M, H)."""
    M, H = x.shape
    tm = _pick_row_tile(M)
    row_spec = pl.BlockSpec((tm, H), lambda i: (i, 0))
    vec_spec = pl.BlockSpec((1, H), lambda i: (0, 0))
    has_res = residual is not None
    in_specs = [row_spec] + ([row_spec] if has_res else []) + [vec_spec, vec_spec]
    args = (x,) + ((residual,) if has_res else ()) + (g.reshape(1, H), b.reshape(1, H))
    return pl.pallas_call(
        functools.partial(_layernorm_kernel, eps=eps, has_residual=has_res),
        out_shape=jax.ShapeDtypeStruct((M, H), jnp.float32),
        grid=(M // tm,),
        in_specs=in_specs,
        out_specs=row_spec,
        compiler_params=pltpu.CompilerParams(dimension_semantics=("parallel",)),
    )(*args)


def _attn_kernel(qkv_ref, m_ref, o_ref, *, nh, dh, scale):
    H = nh * dh
    qkv = qkv_ref[0]                 # (S, 3H) — fused Q|K|V slab, f32
    mask = m_ref[0]                  # (1, S) additive mask
    outs = []
    # Static unroll over heads: every head of this batch element is processed
    # in one grid step (no per-head launches, no JAX transposes).
    for h in range(nh):
        q = qkv[:, h * dh:(h + 1) * dh].astype(MXU_DTYPE)
        k = qkv[:, H + h * dh:H + (h + 1) * dh].astype(MXU_DTYPE)
        v = qkv[:, 2 * H + h * dh:2 * H + (h + 1) * dh].astype(MXU_DTYPE)
        # q @ k.T without materializing the transpose.
        s = jax.lax.dot_general(q, k, (((1,), (1,)), ((), ())),
                                preferred_element_type=jnp.float32)
        s = s * scale + mask
        mx = jnp.max(s, axis=-1, keepdims=True)
        e = jnp.exp(s - mx)                              # f32 on the EUP/VPU
        inv = pl.reciprocal(jnp.sum(e, axis=-1, keepdims=True), approx=True)
        p = (e * inv).astype(MXU_DTYPE)
        outs.append(jnp.dot(p, v, preferred_element_type=jnp.float32))
    o_ref[0] = jnp.concatenate(outs, axis=-1).astype(o_ref.dtype)   # lane-dense store


def attention(qkv, addmask, nh, dh):
    """qkv: (B, S, 3*H) fused projections; addmask: (B, 1, S); returns (B, S, H)."""
    B, S, H3 = qkv.shape
    H = nh * dh
    return pl.pallas_call(
        functools.partial(_attn_kernel, nh=nh, dh=dh, scale=1.0 / math.sqrt(dh)),
        out_shape=jax.ShapeDtypeStruct((B, S, H), jnp.float32),
        grid=(B,),
        in_specs=[pl.BlockSpec((1, S, H3), lambda b: (b, 0, 0)),
                  pl.BlockSpec((1, 1, S), lambda b: (b, 0, 0))],
        out_specs=pl.BlockSpec((1, S, H), lambda b: (b, 0, 0)),
        compiler_params=pltpu.CompilerParams(dimension_semantics=("parallel",)),
    )(qkv, addmask)


def _head_kernel(x_ref, pw_ref, pb_ref, cw_ref, cb_ref, oh_ref, logits_ref, loss_ref):
    # BERT pooler: tanh(cls @ Wp + bp)   (kept f32 — tiny matmuls)
    pooled = jnp.tanh(
        jnp.dot(x_ref[...], pw_ref[...], preferred_element_type=jnp.float32)
        + pb_ref[...])
    # classifier head
    logits = (jnp.dot(pooled, cw_ref[...], preferred_element_type=jnp.float32)
              + cb_ref[...])
    logits_ref[...] = logits
    # CrossEntropyLoss (mean reduction)
    mx = jnp.max(logits, axis=-1, keepdims=True)
    lse = mx + jnp.log(jnp.sum(jnp.exp(logits - mx), axis=-1, keepdims=True))
    nll = lse - jnp.sum(oh_ref[...] * logits, axis=-1, keepdims=True)   # (B, 1)
    loss_ref[...] = jnp.mean(nll, axis=0, keepdims=True)                # (1, 1)


def pooler_classifier_loss(cls_tok, pool_w, pool_b, cls_w, cls_b, onehot):
    """Fused pooler + classifier + cross-entropy; returns (logits, scalar loss)."""
    B, H = cls_tok.shape
    C = cls_w.shape[1]
    logits, loss = pl.pallas_call(
        _head_kernel,
        out_shape=(jax.ShapeDtypeStruct((B, C), jnp.float32),
                   jax.ShapeDtypeStruct((1, 1), jnp.float32)),
        grid=(1,),
        in_specs=[pl.BlockSpec((B, H), lambda i: (0, 0)),
                  pl.BlockSpec((H, H), lambda i: (0, 0)),
                  pl.BlockSpec((1, H), lambda i: (0, 0)),
                  pl.BlockSpec((H, C), lambda i: (0, 0)),
                  pl.BlockSpec((1, C), lambda i: (0, 0)),
                  pl.BlockSpec((B, C), lambda i: (0, 0))],
        out_specs=(pl.BlockSpec((B, C), lambda i: (0, 0)),
                   pl.BlockSpec((1, 1), lambda i: (0, 0))),
    )(cls_tok, pool_w, pool_b.reshape(1, H), cls_w, cls_b.reshape(1, C), onehot)
    return logits, loss[0, 0]


# ----------------------------------------------------------------------------
# Parameter init (deterministic, synthetic — matches BertModel + classifier)
# ----------------------------------------------------------------------------
def init_params(key, cfg):
    H = cfg["hidden_size"]
    I = cfg["intermediate_size"]
    keys = iter(jax.random.split(key, 256))

    def w(shape):
        return (0.02 * jax.random.normal(next(keys), shape)).astype(jnp.float32)

    params = {
        "word_emb": w((cfg["vocab_size"], H)),
        "pos_emb": w((cfg["max_position_embeddings"], H)),
        "type_emb": w((cfg["type_vocab_size"], H)),
        "emb_ln_g": jnp.ones((H,), jnp.float32),
        "emb_ln_b": jnp.zeros((H,), jnp.float32),
        "pool_w": w((H, H)),
        "pool_b": jnp.zeros((H,), jnp.float32),
        "cls_w": w((H, cfg["num_labels"])),
        "cls_b": jnp.zeros((cfg["num_labels"],), jnp.float32),
        "layers": [],
    }
    for _ in range(cfg["num_hidden_layers"]):
        params["layers"].append({
            # fused Q|K|V projection (single (H, 3H) matmul)
            "wqkv": w((H, 3 * H)), "bqkv": jnp.zeros((3 * H,), jnp.float32),
            "wo": w((H, H)), "bo": jnp.zeros((H,), jnp.float32),
            "ln1_g": jnp.ones((H,), jnp.float32), "ln1_b": jnp.zeros((H,), jnp.float32),
            "w1": w((H, I)), "b1": jnp.zeros((I,), jnp.float32),
            "w2": w((I, H)), "b2": jnp.zeros((H,), jnp.float32),
            "ln2_g": jnp.ones((H,), jnp.float32), "ln2_b": jnp.zeros((H,), jnp.float32),
        })
    return params


# ----------------------------------------------------------------------------
# Forward pass: Model.forward(input_ids, attention_mask, labels) -> (loss, logits)
# ----------------------------------------------------------------------------
def model_forward(params, input_ids, attention_mask, labels, cfg):
    B, S = input_ids.shape
    H = cfg["hidden_size"]
    nh = cfg["num_attention_heads"]
    dh = H // nh

    # --- BERT embeddings (gathers are plain-JAX glue) ---
    x = (params["word_emb"][input_ids]
         + params["pos_emb"][:S][None, :, :]
         + params["type_emb"][0][None, None, :])
    x = x.reshape(B * S, H)
    x = layernorm(x, params["emb_ln_g"], params["emb_ln_b"])
    # TODO(synk): nn.Dropout treated as identity (eval mode); training-mode
    # dropout would use pltpu.prng_seed / pltpu.prng_random_bits.

    addmask = ((1.0 - attention_mask.astype(jnp.float32)) * -10000.0).reshape(B, 1, S)

    # --- BERT encoder (per layer: 4 dense calls + 1 attention + 2 fused LN) ---
    for layer in params["layers"]:
        qkv = dense(x, layer["wqkv"], layer["bqkv"])                 # (B*S, 3H)
        ctx = attention(qkv.reshape(B, S, 3 * H), addmask, nh, dh)   # (B, S, H)
        attn_out = dense(ctx.reshape(B * S, H), layer["wo"], layer["bo"])
        x = layernorm(attn_out, layer["ln1_g"], layer["ln1_b"], residual=x)
        ffn = dense(x, layer["w1"], layer["b1"], activation="gelu")
        ffn = dense(ffn, layer["w2"], layer["b2"])
        x = layernorm(ffn, layer["ln2_g"], layer["ln2_b"], residual=x)

    # --- pooler + dropout(identity) + classifier + CrossEntropyLoss, fused ---
    cls_tok = x.reshape(B, S, H)[:, 0, :]                            # (B, H)
    onehot = jax.nn.one_hot(labels.reshape(-1), cfg["num_labels"], dtype=jnp.float32)
    logits, loss = pooler_classifier_loss(
        cls_tok, params["pool_w"], params["pool_b"],
        params["cls_w"], params["cls_b"], onehot)
    return loss, logits


# ----------------------------------------------------------------------------
if __name__ == "__main__":
    cfg = dict(
        vocab_size=100,
        hidden_size=32,
        num_hidden_layers=2,
        num_attention_heads=2,
        intermediate_size=64,
        max_position_embeddings=64,
        type_vocab_size=2,
        num_labels=2,
        hidden_dropout_prob=0.1,
    )

    key = jax.random.PRNGKey(0)
    kp, kid, kmask, klab = jax.random.split(key, 4)

    B, S = 2, 8
    params = init_params(kp, cfg)
    input_ids = jax.random.randint(kid, (B, S), 0, cfg["vocab_size"], dtype=jnp.int32)
    attention_mask = jnp.ones((B, S), dtype=jnp.int32).at[:, -2:].set(0)
    labels = jax.random.randint(klab, (B,), 0, cfg["num_labels"], dtype=jnp.int32)

    loss, logits = model_forward(params, input_ids, attention_mask, labels, cfg)
    jax.block_until_ready((loss, logits))

    assert logits.shape == (B, cfg["num_labels"])
    assert loss.shape == ()
    assert bool(jnp.isfinite(loss))
    print("KERNEL_OK")
</pallas_src>

<mosaic_0001>
module attributes {stable_mosaic.version = 11 : i64} {
  func.func @_layernorm_kernel(%arg0: i32, %arg1: memref<16x32xf32, #tpu.memory_space<vmem>>, %arg2: memref<1x32xf32, #tpu.memory_space<vmem>>, %arg3: memref<1x32xf32, #tpu.memory_space<vmem>>, %arg4: memref<16x32xf32, #tpu.memory_space<vmem>>) attributes {dimension_semantics = [#tpu.dimension_semantics<parallel>], iteration_bounds = array<i64: 1>, scalar_prefetch = 0 : i64, scratch_operands = 0 : i64, tpu.core_type = #tpu.core_type<tc>, window_params = [{transform_indices = @transform_0, window_bounds = array<i64: 16, 32>}, {pipeline_mode = #tpu.pipeline_mode<synchronous>, transform_indices = @transform_1, window_bounds = array<i64: 1, 32>}, {pipeline_mode = #tpu.pipeline_mode<synchronous>, transform_indices = @transform_2, window_bounds = array<i64: 1, 32>}, {transform_indices = @transform_3, window_bounds = array<i64: 16, 32>}]} {
    %c0 = arith.constant 0 : index
    %c0_0 = arith.constant 0 : index
    %0 = vector.load %arg1[%c0, %c0_0] : memref<16x32xf32, #tpu.memory_space<vmem>>, vector<16x32xf32>
    %cst = arith.constant dense<0.000000e+00> : vector<16xf32>
    %1 = vector.multi_reduction <add>, %0, %cst [1] : vector<16x32xf32> to vector<16xf32>
    %2 = vector.shape_cast %1 : vector<16xf32> to vector<16x1xf32>
    %cst_1 = arith.constant 3.200000e+01 : f32
    %3 = vector.broadcast %cst_1 : f32 to vector<16x1xf32>
    %4 = arith.divf %2, %3 : vector<16x1xf32>
    %5 = vector.broadcast %4 : vector<16x1xf32> to vector<16x32xf32>
    %6 = arith.subf %0, %5 : vector<16x32xf32>
    %7 = arith.mulf %6, %6 : vector<16x32xf32>
    %cst_2 = arith.constant dense<0.000000e+00> : vector<16xf32>
    %8 = vector.multi_reduction <add>, %7, %cst_2 [1] : vector<16x32xf32> to vector<16xf32>
    %9 = vector.shape_cast %8 : vector<16xf32> to vector<16x1xf32>
    %cst_3 = arith.constant 3.200000e+01 : f32
    %10 = vector.broadcast %cst_3 : f32 to vector<16x1xf32>
    %11 = arith.divf %9, %10 : vector<16x1xf32>
    %cst_4 = arith.constant 9.99999996E-13 : f32
    %12 = vector.broadcast %cst_4 : f32 to vector<16x1xf32>
    %13 = arith.addf %11, %12 : vector<16x1xf32>
    %14 = math.rsqrt %13 : vector<16x1xf32>
    %15 = vector.broadcast %4 : vector<16x1xf32> to vector<16x32xf32>
    %16 = arith.subf %0, %15 : vector<16x32xf32>
    %17 = vector.broadcast %14 : vector<16x1xf32> to vector<16x32xf32>
    %18 = arith.mulf %16, %17 : vector<16x32xf32>
    %c0_5 = arith.constant 0 : index
    %c0_6 = arith.constant 0 : index
    %19 = vector.load %arg2[%c0_5, %c0_6] : memref<1x32xf32, #tpu.memory_space<vmem>>, vector<1x32xf32>
    %20 = vector.broadcast %19 : vector<1x32xf32> to vector<16x32xf32>
    %21 = arith.mulf %18, %20 : vector<16x32xf32>
    %c0_7 = arith.constant 0 : index
    %c0_8 = arith.constant 0 : index
    %22 = vector.load %arg3[%c0_7, %c0_8] : memref<1x32xf32, #tpu.memory_space<vmem>>, vector<1x32xf32>
    %23 = vector.broadcast %22 : vector<1x32xf32> to vector<16x32xf32>
    %24 = arith.addf %21, %23 : vector<16x32xf32>
    %c0_9 = arith.constant 0 : index
    %c0_10 = arith.constant 0 : index
    %25 = vector.load %arg4[%c0_9, %c0_10] : memref<16x32xf32, #tpu.memory_space<vmem>>, vector<16x32xf32>
    tpu.vector_store %arg4[%c0_9, %c0_10], %24 {strides = array<i32>} : memref<16x32xf32, #tpu.memory_space<vmem>>, vector<16x32xf32>,
    return
  }
  func.func @transform_0(%arg0: i32) -> (i32, i32) {
    %c0_i32 = arith.constant 0 : i32
    %c0_i32_0 = arith.constant 0 : i32
    return %arg0, %c0_i32 : i32, i32
  }
  func.func @transform_1(%arg0: i32) -> (i32, i32) {
    %c0_i32 = arith.constant 0 : i32
    %c0_i32_0 = arith.constant 0 : i32
    %c0_i32_1 = arith.constant 0 : i32
    return %c0_i32, %c0_i32_0 : i32, i32
  }
  func.func @transform_2(%arg0: i32) -> (i32, i32) {
    %c0_i32 = arith.constant 0 : i32
    %c0_i32_0 = arith.constant 0 : i32
    %c0_i32_1 = arith.constant 0 : i32
    return %c0_i32, %c0_i32_0 : i32, i32
  }
  func.func @transform_3(%arg0: i32) -> (i32, i32) {
    %c0_i32 = arith.constant 0 : i32
    %c0_i32_0 = arith.constant 0 : i32
    return %arg0, %c0_i32 : i32, i32
  }
}

</mosaic_0001>

<llo_original>
// kernel: tpu_custom_call.1
$region0: #{tpu_custom_call.1}
  #allocation0 [shape = 'u32[]', space=smem, size = 0x4, offset = 0x4, fixed_abs, tag = 'smem constant byte address 0x4 - core index']
  #allocation1 [shape = 'u32[144,128]{1,0:T(1,128)}', space=vmem, size = 0x12000, scoped, tag = 'internal scratch']
  %s0 = inlined_call_operand.hbm [shape: f32[16,32], index: 0, kind: input, shape index: {}]
  %s1 = inlined_call_operand.vmem [shape: f32[1,32], index: 1, kind: input, shape index: {}]
  %s2 = inlined_call_operand.vmem [shape: f32[1,32], index: 2, kind: input, shape index: {}]
  %s3 = inlined_call_operand.hbm [shape: f32[16,32], index: 3, kind: output, shape index: {}]
  %s4 = sld [smem:[#allocation0]]
  $region26: #{tpu_custom_call.1} parent=0
    _
  %s6 = ssub.s32 1, %s4
  %s7 = scalar_select 0, %s6, %s4
  $region1: #{tpu_custom_call.1} parent=0
    #allocation2 [shape = 'u8[8192]{0}', space=vmem, size = 0x2000, scoped, tag = 'input window, operand 0, single buffered']
    #allocation3 [shape = 's32[1]{0}', space=sflag, size = 0x4, scoped, tag = 'scoped memory for tpu_custom_call.1']
    #allocation4 [shape = 's32[1]{0}', space=sflag, size = 0x4, scoped, tag = 'scoped memory for tpu_custom_call.1']
    #allocation5 [shape = 'u8[8192]{0}', space=vmem, size = 0x2000, scoped, tag = 'output window, operand 0, single buffered']
    %8 = vsyncpa [#allocation3], 0
    %9 = vsyncpa [#allocation4], 0
    // Predicated region
    $region2: #{tpu_custom_call.1} parent=1 // pred_check
      _
    $region3: #{tpu_custom_call.1} parent=1 // pred_check_branch
      %11 = sbr.rel (0) target = $region5
    $region4: #{tpu_custom_call.1} parent=1 // pred_region
      %s13 = ssub.s32 256, 256
      %14 = vsyncadd [#allocation3], %s13
      %s15 = sshll.u32 [#allocation2], 4
      %s16 = int_to_ptr.vmem [resolvable:$true] %s15
      %21 = dma.hbm_to_vmem [thread:$0]  %s0, 256, %s16, [#allocation3], 128, 128, 8
    $region5: #{tpu_custom_call.1} parent=1 // pred_fallthru
      _
    // Predicated region
    $region6: #{tpu_custom_call.1} parent=1 // pred_check
      _
    $region7: #{tpu_custom_call.1} parent=1 // pred_check_branch
      %23 = sbr.rel (0) target = $region9
    $region8: #{tpu_custom_call.1} parent=1 // pred_region
      _
    $region9: #{tpu_custom_call.1} parent=1 // pred_fallthru
      _
    // Predicated region
    $region10: #{tpu_custom_call.1} parent=1 // pred_check
      _
    $region11: #{tpu_custom_call.1} parent=1 // pred_check_branch
      %25 = sbr.rel (0) target = $region13
    $region12: #{tpu_custom_call.1} parent=1 // pred_region
      _
    $region13: #{tpu_custom_call.1} parent=1 // pred_fallthru
      _
    // Predicated region
    $region14: #{tpu_custom_call.1} parent=1 // pred_check
      _
    $region15: #{tpu_custom_call.1} parent=1 // pred_check_branch
      %27 = sbr.rel (0) target = $region17
    $region16: #{tpu_custom_call.1} parent=1 // pred_region
      %28 = dma.done [#allocation3], 256
    $region17: #{tpu_custom_call.1} parent=1 // pred_fallthru
      _
    %v29 = vld [vmem:[#allocation2] sm:$0xff]
    %v30 = vld [vmem:[#allocation2 + $0x8] sm:$0xff]
    %vm31 = vcmask 261120
    %v32 = vsel %vm31, %v29, 0.0
    %33 = vadd.xlane.f32.xlu0 %v32
    %v34 = vpop.xlane.xlu0 %33
    %v35 = vsel %vm31, %v30, 0.0
    %36 = vadd.xlane.f32.xlu0 %v35
    %v37 = vpop.xlane.xlu0 %36
    %v38 = vrcp.pop 32.0
    %v39 = vmul.f32 %v34, %v38
    %v40 = vmul.f32 %v37, %v38
    %v41 = vsub.f32 %v29, %v39
    %v42 = vsub.f32 %v30, %v40
    %v43 = vmul.f32 %v41, %v41
    %v44 = vmul.f32 %v42, %v42
    %v45 = vsel %vm31, %v43, 0.0
    %46 = vadd.xlane.f32.xlu0 %v45
    %v47 = vpop.xlane.xlu0 %46
    %v48 = vsel %vm31, %v44, 0.0
    %49 = vadd.xlane.f32.xlu0 %v48
    %v50 = vpop.xlane.xlu0 %49
    %v51 = vmul.f32 %v47, %v38
    %v52 = vmul.f32 %v50, %v38
    %v53 = vadd.f32 %v51, 1e-12
    %v54 = vadd.f32 %v52, 1e-12
    %v55 = vrsqrt.pop %v53
    %v56 = vrsqrt.pop %v54
    %v57 = vmul.f32 %v41, %v55
    %v58 = vmul.f32 %v42, %v56
    %v59 = vld [vmem:[%s1] sm:$0x1]
    %v61 = vlaneseq
    %v62 = vshrl.u32 %v61, 7
    %v63 = vsub.s32 0, %v62
    %v64 = vrot.slane %v59, %v63
    %v66 = vmul.f32 %v57, %v64
    %v67 = vmul.f32 %v58, %v64
    %v68 = vld [vmem:[%s2] sm:$0x1]
    %v70 = vlaneseq
    %v71 = vshrl.u32 %v70, 7
    %v72 = vsub.s32 0, %v71
    %v73 = vrot.slane %v68, %v72
    %v75 = vadd.f32 %v66, %v73
    %v76 = vadd.f32 %v67, %v73
    %77 = vst.msk [vmem:[#allocation5] sm:$0xff] %vm31, %v75
    %78 = vst.msk [vmem:[#allocation5 + $0x8] sm:$0xff] %vm31, %v76
    // Predicated region
    $region18: #{tpu_custom_call.1} parent=1 // pred_check
      _
    $region19: #{tpu_custom_call.1} parent=1 // pred_check_branch
      %80 = sbr.rel (0) target = $region21
    $region20: #{tpu_custom_call.1} parent=1 // pred_region
      %s82 = ssub.s32 256, 256
      %83 = vsyncadd [#allocation4], %s82
      %s84 = sshll.u32 [#allocation5], 4
      %s85 = int_to_ptr.vmem [resolvable:$true] %s84
      %90 = dma.vmem_to_hbm [thread:$0]  %s85, 256, %s3, [#allocation4], 128, 128, 8
    $region21: #{tpu_custom_call.1} parent=1 // pred_fallthru
      _
    // Predicated region
    $region22: #{tpu_custom_call.1} parent=1 // pred_check
      _
    $region23: #{tpu_custom_call.1} parent=1 // pred_check_branch
      %92 = sbr.rel (0) target = $region25
    $region24: #{tpu_custom_call.1} parent=1 // pred_region
      %93 = dma.done [#allocation4], 256
    $region25: #{tpu_custom_call.1} parent=1 // pred_fallthru
      _
    %94 = vsyncpa [#allocation3], 1
    %95 = vsyncpa [#allocation4], 1

</llo_original>
